<compile_context>
chip_gen: v5e
topology: v5e:2x2
jax: 0.10.0
libtpu: 0.0.40
codegen_flags: <defaults>
</compile_context>

<pallas_src>
import functools

import jax
import jax.numpy as jnp
from jax.experimental import pallas as pl
from jax.experimental.pallas import tpu as pltpu

# ----------------------------------------------------------------------------
# Scaled-down configuration (documents the correspondence to the reference).
# ----------------------------------------------------------------------------
B = 2
IMG_CHANS, RANGE_CHANS = 3, 5
IMG_SIZE = (32, 64)          # reference: (256, 1024)
RANGE_SIZE = (16, 128)       # reference: (64, 2048)
RAW_IMG_SIZE = (16, 32)      # raw camera image size before bilinear resize
IMG_PATCH = (8, 8)           # reference: (16, 16)
RANGE_PATCH = (2, 8)         # reference: with_patch_2d=(2, 8)
IMG_GRID = (IMG_SIZE[0] // IMG_PATCH[0], IMG_SIZE[1] // IMG_PATCH[1])            # (4, 8)
RANGE_GRID = (RANGE_SIZE[0] // RANGE_PATCH[0], RANGE_SIZE[1] // RANGE_PATCH[1])  # (8, 16)
EMBED_DIM, DEPTH, NUM_HEADS = 32, 1, 4
DEC_EMBED_DIM, DEC_DEPTH, DEC_NUM_HEADS = 32, 1, 4
MLP_RATIO = 4
IMG_MASK_RATIO = RANGE_MASK_RATIO = 0.75
# cross-modal column window on the range grid (reference: cols 48:80 of 256,
# width = img_grid_w // 2); scaled analogue on our 16-wide range grid:
CM_C0, CM_C1 = 6, 10


# ----------------------------------------------------------------------------
# small helpers
# ----------------------------------------------------------------------------
def _round_up(n, m):
    return ((n + m - 1) // m) * m


def _full_spec(shape):
    n = len(shape)
    return pl.BlockSpec(shape, lambda i, _n=n: (0,) * _n)


def _ln_inline(x, g, b, eps=1e-5):
    mean = jnp.mean(x, axis=-1, keepdims=True)
    var = jnp.mean((x - mean) ** 2, axis=-1, keepdims=True)
    return (x - mean) * jax.lax.rsqrt(var + eps) * g + b


def _nbytes(a):
    return int(a.size) * int(a.dtype.itemsize)


# ----------------------------------------------------------------------------
# Pallas kernels (the hot path)
# ----------------------------------------------------------------------------
def _vit_block_kernel(x_ref, ln1g_ref, ln1b_ref, qkvw_ref, qkvb_ref,
                      projw_ref, projb_ref, ln2g_ref, ln2b_ref,
                      fc1w_ref, fc1b_ref, fc2w_ref, fc2b_ref, o_ref,
                      *, heads, l_valid):
    """One full pre-norm ViT block for the WHOLE batch, entirely in VMEM.

    x_ref: (B, Lp, E) with Lp padded to a multiple of 8; keys >= l_valid are
    masked in softmax so pad rows never leak into valid outputs.
    """
    Bq, Lp, E = x_ref.shape
    hd = E // heads
    scale = float(hd) ** -0.5
    BL = Bq * Lp
    bf16 = jnp.bfloat16

    x = x_ref[...].reshape(BL, E)                          # f32 residual stream

    # ---------------- attention ----------------
    h1 = _ln_inline(x, ln1g_ref[...], ln1b_ref[...])
    qkv = (jnp.dot(h1.astype(bf16), qkvw_ref[...],
                   preferred_element_type=jnp.float32) + qkvb_ref[...])  # (BL, 3E)

    def split_heads(off):
        # Head split via static lane slices, then stacked along a NEW leading
        # (major) axis -> (heads, BL, hd) -> (heads*B, Lp, hd).  Reshapes only
        # touch major dims (Lp is a multiple of 8).  A 4-D transpose / lane
        # concat is deliberately avoided (lowering robustness).
        parts = [qkv[:, off + h * hd: off + (h + 1) * hd] for h in range(heads)]
        return jnp.stack(parts, axis=0).reshape(heads * Bq, Lp, hd)

    q = split_heads(0) * scale
    k = split_heads(E)
    v = split_heads(2 * E)

    # batched scores for all heads / batch elements at once
    s = jnp.einsum("bqd,bkd->bqk", q.astype(bf16), k.astype(bf16),
                   preferred_element_type=jnp.float32)     # (heads*B, Lp, Lp)
    if l_valid < Lp:
        kid = jax.lax.broadcasted_iota(jnp.int32, s.shape, 2)
        s = jnp.where(kid < l_valid, s, -1e30)
    s = s - jnp.max(s, axis=-1, keepdims=True)
    e = jnp.exp(s)
    p = e * pl.reciprocal(jnp.sum(e, axis=-1, keepdims=True), approx=True)

    o = jnp.einsum("bqk,bkd->bqd", p.astype(bf16), v.astype(bf16),
                   preferred_element_type=jnp.float32)     # (heads*B, Lp, hd)
    o = o.reshape(heads, BL, hd)

    # out-projection folded per head with WRAPPER-pre-split weights
    # (projw_ref: (heads, hd, E)); FLOP-identical to one (BL,E)@(E,E) matmul.
    attn = jnp.zeros((BL, E), jnp.float32)
    for h in range(heads):
        attn = attn + jnp.dot(o[h].astype(bf16), projw_ref[h],
                              preferred_element_type=jnp.float32)
    x = x + attn + projb_ref[...]

    # ---------------- MLP ----------------
    h2 = _ln_inline(x, ln2g_ref[...], ln2b_ref[...])
    hm = (jnp.dot(h2.astype(bf16), fc1w_ref[...],
                  preferred_element_type=jnp.float32) + fc1b_ref[...])
    # TODO(synk): tanh-approx GELU (reference nn.GELU is exact erf).
    c = 0.7978845608028654  # sqrt(2/pi)
    hm = 0.5 * hm * (1.0 + jnp.tanh(c * (hm + 0.044715 * hm * hm * hm)))
    x = x + jnp.dot(hm.astype(bf16), fc2w_ref[...],
                    preferred_element_type=jnp.float32) + fc2b_ref[...]

    # TODO(synk): with E=32 the output store is lane-sparse (25% of a vreg row);
    # disappears at real-model embed dims (>=128).
    o_ref[...] = x.reshape(Bq, Lp, E)


def vit_block(x, p, heads, l_valid):
    """Fused pre-norm ViT block over the whole padded batch in one grid step."""
    Bq, Lp, E = x.shape
    H = p["fc1_w"].shape[-1]
    hd = E // heads
    bf16, f32 = jnp.bfloat16, jnp.float32

    args = [
        x.astype(f32),
        p["ln1_g"].reshape(1, E).astype(f32), p["ln1_b"].reshape(1, E).astype(f32),
        p["qkv_w"].astype(bf16), p["qkv_b"].reshape(1, 3 * E).astype(f32),
        p["proj_w"].reshape(heads, hd, E).astype(bf16),
        p["proj_b"].reshape(1, E).astype(f32),
        p["ln2_g"].reshape(1, E).astype(f32), p["ln2_b"].reshape(1, E).astype(f32),
        p["fc1_w"].astype(bf16), p["fc1_b"].reshape(1, H).astype(f32),
        p["fc2_w"].astype(bf16), p["fc2_b"].reshape(1, E).astype(f32),
    ]

    BL = Bq * Lp
    flops = int(2 * BL * E * 3 * E                              # qkv
                + 2 * 2 * heads * Bq * Lp * Lp * hd             # scores + attn@V
                + 2 * BL * E * E                                # out proj
                + 2 * 2 * BL * E * H)                           # fc1 + fc2
    transc = int(heads * Bq * Lp * Lp + BL * H + 4 * BL)
    bytes_acc = int(sum(_nbytes(a) for a in args) + BL * E * 4)

    return pl.pallas_call(
        functools.partial(_vit_block_kernel, heads=heads, l_valid=l_valid),
        out_shape=jax.ShapeDtypeStruct((Bq, Lp, E), jnp.float32),
        grid=(1,),
        in_specs=[_full_spec(a.shape) for a in args],
        out_specs=_full_spec((Bq, Lp, E)),
        compiler_params=pltpu.CompilerParams(
            dimension_semantics=("arbitrary",),
            vmem_limit_bytes=32 * 1024 * 1024),
        cost_estimate=pl.CostEstimate(flops=flops, transcendentals=transc,
                                      bytes_accessed=bytes_acc),
    )(*args)


def _matmul_bias_kernel(x_ref, w_ref, b_ref, o_ref):
    o_ref[...] = (
        jnp.dot(x_ref[...], w_ref[...], preferred_element_type=jnp.float32)
        + b_ref[...]
    )


def _pad_rows(x2, mp):
    m = x2.shape[0]
    if mp == m:
        return x2
    return jnp.pad(x2, ((0, mp - m), (0, 0)))


def linear(x, w, b, block_m=512):
    """x: (..., K) @ w: (K, N) + b: (N,); bf16 MXU inputs, M-tiled parallel grid."""
    lead = x.shape[:-1]
    K = x.shape[-1]
    N = w.shape[-1]
    x2 = x.reshape(-1, K)
    M = x2.shape[0]
    bm = min(block_m, _round_up(M, 8))
    Mp = _round_up(M, bm)
    x2 = _pad_rows(x2, Mp).astype(jnp.bfloat16)
    out = pl.pallas_call(
        _matmul_bias_kernel,
        out_shape=jax.ShapeDtypeStruct((Mp, N), jnp.float32),
        grid=(Mp // bm,),
        in_specs=[
            pl.BlockSpec((bm, K), lambda i: (i, 0)),
            pl.BlockSpec((K, N), lambda i: (0, 0)),
            pl.BlockSpec((1, N), lambda i: (0, 0)),
        ],
        out_specs=pl.BlockSpec((bm, N), lambda i: (i, 0)),
        compiler_params=pltpu.CompilerParams(dimension_semantics=("parallel",)),
        cost_estimate=pl.CostEstimate(
            flops=int(2 * Mp * K * N), transcendentals=0,
            bytes_accessed=int(Mp * K * 2 + K * N * 2 + Mp * N * 4 + N * 4)),
    )(x2, w.astype(jnp.bfloat16), b.reshape(1, N).astype(jnp.float32))
    return out[:M].reshape(*lead, N)


def _ln_linear_kernel(x_ref, g_ref, b_ref, w_ref, bias_ref, o_ref):
    h = _ln_inline(x_ref[...], g_ref[...], b_ref[...])
    o_ref[...] = (
        jnp.dot(h.astype(jnp.bfloat16), w_ref[...],
                preferred_element_type=jnp.float32) + bias_ref[...]
    )


def ln_linear(x, gamma, beta, w, b, block_m=512):
    """Fused LayerNorm + Linear (encoder norm->decoder_embed, dec norm->dec_pred)."""
    lead = x.shape[:-1]
    E = x.shape[-1]
    N = w.shape[-1]
    x2 = x.reshape(-1, E)
    M = x2.shape[0]
    bm = min(block_m, _round_up(M, 8))
    Mp = _round_up(M, bm)
    x2 = _pad_rows(x2, Mp).astype(jnp.float32)
    out = pl.pallas_call(
        _ln_linear_kernel,
        out_shape=jax.ShapeDtypeStruct((Mp, N), jnp.float32),
        grid=(Mp // bm,),
        in_specs=[
            pl.BlockSpec((bm, E), lambda i: (i, 0)),
            pl.BlockSpec((1, E), lambda i: (0, 0)),
            pl.BlockSpec((1, E), lambda i: (0, 0)),
            pl.BlockSpec((E, N), lambda i: (0, 0)),
            pl.BlockSpec((1, N), lambda i: (0, 0)),
        ],
        out_specs=pl.BlockSpec((bm, N), lambda i: (i, 0)),
        compiler_params=pltpu.CompilerParams(dimension_semantics=("parallel",)),
        cost_estimate=pl.CostEstimate(
            flops=int(2 * Mp * E * N + 8 * Mp * E), transcendentals=int(Mp),
            bytes_accessed=int(Mp * E * 4 + E * N * 2 + Mp * N * 4 + 2 * E * 4 + N * 4)),
    )(x2, gamma.reshape(1, E).astype(jnp.float32),
      beta.reshape(1, E).astype(jnp.float32),
      w.astype(jnp.bfloat16), b.reshape(1, N).astype(jnp.float32))
    return out[:M].reshape(*lead, N)


def _mae_loss_kernel(pred_ref, tgt_ref, mask_ref, o_ref):
    pred = pred_ref[...]                                   # (M, P)
    tgt = tgt_ref[...]                                     # (M, P)
    mask = mask_ref[...]                                   # (1, M) lane-dense
    n = tgt.shape[-1]
    mean = jnp.mean(tgt, axis=-1, keepdims=True)
    # torch .var() default is unbiased (N-1), as used by MAE norm_pix_loss
    var = jnp.sum((tgt - mean) ** 2, axis=-1, keepdims=True) / (n - 1)
    tgt_n = (tgt - mean) * jax.lax.rsqrt(var + 1e-6)
    sq = (pred - tgt_n) ** 2                               # (M, P)
    # sum_i mask_i * mean_j sq_ij  ==  (mask @ sq).sum() / P
    num_row = jnp.dot(mask, sq, preferred_element_type=jnp.float32)   # (1, P)
    num = jnp.sum(num_row, axis=-1, keepdims=True)                    # (1, 1)
    den = jnp.maximum(jnp.sum(mask, axis=-1, keepdims=True), 1.0)     # (1, 1)
    o_ref[...] = num / (den * n)


def mae_masked_loss(pred2d, target2d, mask_row):
    """(per-patch norm-pix MSE * mask).sum() / mask.sum(), fused, scalar out."""
    M, P = pred2d.shape
    out = pl.pallas_call(
        _mae_loss_kernel,
        out_shape=jax.ShapeDtypeStruct((1, 1), jnp.float32),
        grid=(1,),
        in_specs=[
            _full_spec((M, P)),
            _full_spec((M, P)),
            _full_spec((1, M)),
        ],
        out_specs=_full_spec((1, 1)),
        cost_estimate=pl.CostEstimate(
            flops=int(8 * M * P + 2 * M * P), transcendentals=int(M),
            bytes_accessed=int(2 * M * P * 4 + M * 4 + 4)),
    )(pred2d.astype(jnp.float32), target2d.astype(jnp.float32),
      mask_row.reshape(1, M).astype(jnp.float32))
    return out[0, 0]


# ----------------------------------------------------------------------------
# ViT building blocks (composed from the Pallas kernels above)
# ----------------------------------------------------------------------------
def patch_embed(img_nchw, w, b, patch):
    """Conv2d(k=stride=patch) patch embed expressed as patch-extract + matmul."""
    Bq, C, H, W = img_nchw.shape
    ph, pw = patch
    gh, gw = H // ph, W // pw
    x = img_nchw.reshape(Bq, C, gh, ph, gw, pw)
    x = x.transpose(0, 2, 4, 1, 3, 5).reshape(Bq, gh * gw, C * ph * pw)
    return linear(x, w, b)


def patchify(imgs_nchw, patch):
    """MAE patchify ordering: n c (h p) (w q) -> n (h w) (p q c)."""
    Bq, C, H, W = imgs_nchw.shape
    ph, pw = patch
    gh, gw = H // ph, W // pw
    x = imgs_nchw.reshape(Bq, C, gh, ph, gw, pw)
    x = jnp.einsum("nchpwq->nhwpqc", x)
    return x.reshape(Bq, gh * gw, ph * pw * C)


def random_masking(x, mask_ratio, key):
    N, L, D = x.shape
    if mask_ratio == 0.0:
        # fast path: shuffle+restore is a no-op permutation (attention is
        # permutation-equivariant after pos-embed add), so skip argsort/gather.
        ids_restore = jnp.broadcast_to(jnp.arange(L, dtype=jnp.int32)[None], (N, L))
        mask = jnp.zeros((N, L), dtype=x.dtype)
        return x, mask, ids_restore
    len_keep = int(L * (1 - mask_ratio))
    noise = jax.random.uniform(key, (N, L))
    ids_shuffle = jnp.argsort(noise, axis=1)
    ids_restore = jnp.argsort(ids_shuffle, axis=1)
    ids_keep = ids_shuffle[:, :len_keep]
    x_masked = jnp.take_along_axis(
        x, jnp.broadcast_to(ids_keep[:, :, None], (N, len_keep, D)), axis=1
    )
    mask = jnp.ones((N, L), dtype=x.dtype)
    mask = mask.at[:, :len_keep].set(0.0)
    mask = jnp.take_along_axis(mask, ids_restore, axis=1)
    return x_masked, mask, ids_restore


def embed_tokens(imgs_nchw, enc, patch):
    """patch_embed + pos add — hoisted so it is computed once per modality."""
    x = patch_embed(imgs_nchw, enc["patch_w"], enc["patch_b"], patch)
    return x + enc["pos_embed"][:, 1:, :]


def run_blocks(x, blocks, heads):
    """Pad L to a multiple of 8 once, run the fused blocks, slice back."""
    Bq, L, E = x.shape
    Lp = _round_up(L, 8)
    if Lp != L:
        x = jnp.pad(x, ((0, 0), (0, Lp - L), (0, 0)))
    for p in blocks:
        x = vit_block(x, p, heads, L)
    return x[:, :L, :]


def forward_encoder_tokens(tokens, mask_ratio, enc, key, heads):
    """Masking + cls + transformer blocks.  Returns PRE-final-norm latent;
    the encoder norm is fused into decoder_embed (ln_linear)."""
    x, mask, ids_restore = random_masking(tokens, mask_ratio, key)
    cls = enc["cls_token"] + enc["pos_embed"][:, :1, :]
    cls = jnp.broadcast_to(cls, (x.shape[0], 1, cls.shape[-1]))
    x = jnp.concatenate([cls, x], axis=1)
    x = run_blocks(x, enc["blocks"], heads)
    return x, mask, ids_restore


def _decoder_embed_and_restore(x_latent, ids_restore, enc):
    # fused: encoder final LayerNorm + decoder_embed linear
    x = ln_linear(x_latent, enc["norm_g"], enc["norm_b"],
                  enc["dec_embed_w"], enc["dec_embed_b"])
    Bq, Lx, D = x.shape
    L = ids_restore.shape[1]
    mask_tokens = jnp.broadcast_to(enc["mask_token"], (Bq, L + 1 - Lx, D))
    x_ = jnp.concatenate([x[:, 1:, :], mask_tokens], axis=1)
    x_ = jnp.take_along_axis(
        x_, jnp.broadcast_to(ids_restore[:, :, None], (Bq, L, D)), axis=1
    )
    x = jnp.concatenate([x[:, :1, :], x_], axis=1)
    x = x + enc["dec_pos_embed"]
    return x


def forward_patchfy_unpatchfy(latent_full, ids_restore_full, enc, grid):
    x = _decoder_embed_and_restore(latent_full, ids_restore_full, enc)
    Bq, _, D = x.shape
    gh, gw = grid
    unpatch = x[:, 1:, :].reshape(Bq, gh, gw, D)
    return x[:, :1, :], unpatch


def forward_decoder(x_latent, ids_restore, x_mm, enc, dec_heads):
    x = _decoder_embed_and_restore(x_latent, ids_restore, enc)
    x = x + x_mm
    x = run_blocks(x, enc["dec_blocks"], dec_heads)
    # fused: decoder final LayerNorm + decoder_pred linear
    x = ln_linear(x, enc["dec_norm_g"], enc["dec_norm_b"],
                  enc["dec_pred_w"], enc["dec_pred_b"])
    return x[:, 1:, :]


def forward_loss(imgs_nchw, pred, mask, patch):
    target = patchify(imgs_nchw, patch)
    Bq, L, P = target.shape
    return mae_masked_loss(pred.reshape(Bq * L, P),
                           target.reshape(Bq * L, P),
                           mask.reshape(1, Bq * L))


# ----------------------------------------------------------------------------
# Parameter init (deterministic; synthetic weights, no checkpoint loading)
# ----------------------------------------------------------------------------
class KeyGen:
    def __init__(self, seed):
        self._key = jax.random.PRNGKey(seed)

    def __call__(self):
        self._key, k = jax.random.split(self._key)
        return k


def _lin(kg, k, n, scale=0.02):
    return scale * jax.random.normal(kg(), (k, n), jnp.float32), jnp.zeros((n,), jnp.float32)


def _block_params(kg, dim, mlp_ratio):
    qkv_w, qkv_b = _lin(kg, dim, 3 * dim)
    proj_w, proj_b = _lin(kg, dim, dim)
    fc1_w, fc1_b = _lin(kg, dim, dim * mlp_ratio)
    fc2_w, fc2_b = _lin(kg, dim * mlp_ratio, dim)
    return dict(
        ln1_g=jnp.ones((dim,), jnp.float32), ln1_b=jnp.zeros((dim,), jnp.float32),
        qkv_w=qkv_w, qkv_b=qkv_b, proj_w=proj_w, proj_b=proj_b,
        ln2_g=jnp.ones((dim,), jnp.float32), ln2_b=jnp.zeros((dim,), jnp.float32),
        fc1_w=fc1_w, fc1_b=fc1_b, fc2_w=fc2_w, fc2_b=fc2_b,
    )


def init_mae_vit(kg, in_chans, patch, grid, embed, depth, dec_embed, dec_depth, out_chans):
    L = grid[0] * grid[1]
    # TODO(synk): the range encoder's ConvStem patch embed (hidden_dim skip_filters)
    # is approximated by a patchified linear projection (same I/O contract).
    patch_w, patch_b = _lin(kg, in_chans * patch[0] * patch[1], embed)
    dec_embed_w, dec_embed_b = _lin(kg, embed, dec_embed)
    dec_pred_w, dec_pred_b = _lin(kg, dec_embed, patch[0] * patch[1] * out_chans)
    return dict(
        patch_w=patch_w, patch_b=patch_b,
        cls_token=0.02 * jax.random.normal(kg(), (1, 1, embed), jnp.float32),
        pos_embed=0.02 * jax.random.normal(kg(), (1, 1 + L, embed), jnp.float32),
        blocks=[_block_params(kg, embed, MLP_RATIO) for _ in range(depth)],
        norm_g=jnp.ones((embed,), jnp.float32), norm_b=jnp.zeros((embed,), jnp.float32),
        dec_embed_w=dec_embed_w, dec_embed_b=dec_embed_b,
        mask_token=0.02 * jax.random.normal(kg(), (1, 1, dec_embed), jnp.float32),
        dec_pos_embed=0.02 * jax.random.normal(kg(), (1, 1 + L, dec_embed), jnp.float32),
        dec_blocks=[_block_params(kg, dec_embed, MLP_RATIO) for _ in range(dec_depth)],
        dec_norm_g=jnp.ones((dec_embed,), jnp.float32),
        dec_norm_b=jnp.zeros((dec_embed,), jnp.float32),
        dec_pred_w=dec_pred_w, dec_pred_b=dec_pred_b,
    )


# ----------------------------------------------------------------------------
# MAE.forward (training path)
# ----------------------------------------------------------------------------
def mae_forward(batch_dict, params, key):
    # laser_range_in: NHWC -> NCHW (as in the reference .permute(0,3,1,2))
    laser_range_in = jnp.transpose(batch_dict["laser_range_in"], (0, 3, 1, 2))
    raw_images = batch_dict["images"]  # NCHW
    Bq = raw_images.shape[0]

    images = jax.image.resize(
        raw_images, (Bq, IMG_CHANS) + IMG_SIZE, method="bilinear", antialias=False
    )

    k1, k3 = jax.random.split(key, 2)
    img_p, rng_p = params["img"], params["range"]

    # patch embed (+pos) computed once per modality, reused by both encoder passes
    img_tokens = embed_tokens(images, img_p, IMG_PATCH)
    range_tokens = embed_tokens(laser_range_in, rng_p, RANGE_PATCH)

    img_latent, img_mask, img_ids = forward_encoder_tokens(
        img_tokens, IMG_MASK_RATIO, img_p, k1, NUM_HEADS)
    img_latent_full, _, img_ids_full = forward_encoder_tokens(
        img_tokens, 0.0, img_p, None, NUM_HEADS)
    range_latent, range_mask, range_ids = forward_encoder_tokens(
        range_tokens, RANGE_MASK_RATIO, rng_p, k3, NUM_HEADS)
    range_latent_full, _, range_ids_full = forward_encoder_tokens(
        range_tokens, 0.0, rng_p, None, NUM_HEADS)

    img_cls, img_unpatch = forward_patchfy_unpatchfy(
        img_latent_full, img_ids_full, img_p, IMG_GRID)
    range_cls, range_unpatch = forward_patchfy_unpatchfy(
        range_latent_full, range_ids_full, rng_p, RANGE_GRID)

    D = img_unpatch.shape[-1]
    rgh, rgw = RANGE_GRID
    igh, igw = IMG_GRID

    # image tokens -> range-image token grid (detached in the reference)
    img_token_2_range = jnp.zeros((Bq, rgh, rgw, D), dtype=range_latent.dtype)
    img_interp = jax.image.resize(
        jnp.transpose(img_unpatch, (0, 3, 1, 2)),
        (Bq, D, rgh, CM_C1 - CM_C0), method="bilinear", antialias=False)
    img_token_2_range = img_token_2_range.at[:, :, CM_C0:CM_C1, :].set(
        jax.lax.stop_gradient(jnp.transpose(img_interp, (0, 2, 3, 1))))
    # TODO(synk): torch.autograd.Variable / requires_grad bookkeeping has no
    # functional-JAX analogue; only stop_gradient (detach) semantics are kept.

    # range tokens -> image token grid
    range_interp = jax.image.resize(
        jnp.transpose(range_unpatch[:, :, CM_C0:CM_C1, :], (0, 3, 1, 2)),
        (Bq, D, igh, igw), method="bilinear", antialias=False)
    range_token_2_img = jnp.transpose(range_interp, (0, 2, 3, 1))

    img_token_2_range = img_token_2_range.reshape(Bq, -1, D)
    range_token_2_img = range_token_2_img.reshape(Bq, -1, D)
    img_token_2_range = jnp.concatenate([img_cls, img_token_2_range], axis=1)
    range_token_2_img = jnp.concatenate([range_cls, range_token_2_img], axis=1)

    img_pred = forward_decoder(img_latent, img_ids, range_token_2_img, img_p, DEC_NUM_HEADS)
    range_pred = forward_decoder(range_latent, range_ids, img_token_2_range, rng_p, DEC_NUM_HEADS)

    img_loss = forward_loss(images, img_pred, img_mask, IMG_PATCH)
    range_loss = forward_loss(laser_range_in, range_pred, range_mask, RANGE_PATCH)
    loss = range_loss + img_loss

    # training branch return (eval-branch .cpu().numpy() visualization omitted)
    # TODO(synk): eval-branch unpatchify/paste visualization outputs not ported.
    ret_dict = {"loss": loss}
    tb_dict = {"range_loss": range_loss, "img_loss": img_loss}
    return ret_dict, tb_dict, {}


# ----------------------------------------------------------------------------
if __name__ == "__main__":
    kg = KeyGen(0)

    params = {
        "img": init_mae_vit(kg, IMG_CHANS, IMG_PATCH, IMG_GRID,
                            EMBED_DIM, DEPTH, DEC_EMBED_DIM, DEC_DEPTH, IMG_CHANS),
        "range": init_mae_vit(kg, RANGE_CHANS, RANGE_PATCH, RANGE_GRID,
                              EMBED_DIM, DEPTH, DEC_EMBED_DIM, DEC_DEPTH, RANGE_CHANS),
    }

    data_key = jax.random.PRNGKey(0)
    dk1, dk2, dk3, dk4, mask_key = jax.random.split(data_key, 5)
    batch_dict = {
        "images": jax.random.uniform(dk1, (B, IMG_CHANS) + RAW_IMG_SIZE, jnp.float32),
        "laser_range_in": jax.random.normal(
            dk2, (B, RANGE_SIZE[0], RANGE_SIZE[1], RANGE_CHANS), jnp.float32),
        "laser_x": jax.random.normal(dk3, (B, 64), jnp.float32),   # unused by forward
        "laser_y": jax.random.normal(dk4, (B, 64), jnp.float32),   # unused by forward
    }

    ret_dict, tb_dict, _ = mae_forward(batch_dict, params, mask_key)
    loss = jax.block_until_ready(ret_dict["loss"])
    assert jnp.isfinite(loss), "loss is not finite"
    print("KERNEL_OK")
</pallas_src>

<mosaic_0001>
module attributes {stable_mosaic.version = 11 : i64} {
  func.func @_matmul_bias_kernel(%arg0: i32, %arg1: memref<64x192xbf16, #tpu.memory_space<vmem>>, %arg2: memref<192x32xbf16, #tpu.memory_space<vmem>>, %arg3: memref<1x32xf32, #tpu.memory_space<vmem>>, %arg4: memref<64x32xf32, #tpu.memory_space<vmem>>) attributes {dimension_semantics = [#tpu.dimension_semantics<parallel>], iteration_bounds = array<i64: 1>, scalar_prefetch = 0 : i64, scratch_operands = 0 : i64, tpu.core_type = #tpu.core_type<tc>, window_params = [{transform_indices = @transform_0, window_bounds = array<i64: 64, 192>}, {pipeline_mode = #tpu.pipeline_mode<synchronous>, transform_indices = @transform_1, window_bounds = array<i64: 192, 32>}, {pipeline_mode = #tpu.pipeline_mode<synchronous>, transform_indices = @transform_2, window_bounds = array<i64: 1, 32>}, {transform_indices = @transform_3, window_bounds = array<i64: 64, 32>}]} {
    %c0 = arith.constant 0 : index
    %c0_0 = arith.constant 0 : index
    %0 = vector.load %arg1[%c0, %c0_0] : memref<64x192xbf16, #tpu.memory_space<vmem>>, vector<64x192xbf16>
    %c0_1 = arith.constant 0 : index
    %c0_2 = arith.constant 0 : index
    %1 = vector.load %arg2[%c0_1, %c0_2] : memref<192x32xbf16, #tpu.memory_space<vmem>>, vector<192x32xbf16>
    %cst = arith.constant dense<0.000000e+00> : vector<64x32xf32>
    %2 = tpu.matmul %0, %1, %cst {dimension_numbers = #tpu.dot_dimension_numbers<[1], [0], [0], [1], [0, 0, 1, 1], [], []>} : vector<64x192xbf16>, vector<192x32xbf16>, vector<64x32xf32> -> vector<64x32xf32>
    %c0_3 = arith.constant 0 : index
    %c0_4 = arith.constant 0 : index
    %3 = vector.load %arg3[%c0_3, %c0_4] : memref<1x32xf32, #tpu.memory_space<vmem>>, vector<1x32xf32>
    %4 = vector.broadcast %3 : vector<1x32xf32> to vector<64x32xf32>
    %5 = arith.addf %2, %4 : vector<64x32xf32>
    %c0_5 = arith.constant 0 : index
    %c0_6 = arith.constant 0 : index
    %6 = vector.load %arg4[%c0_5, %c0_6] : memref<64x32xf32, #tpu.memory_space<vmem>>, vector<64x32xf32>
    tpu.vector_store %arg4[%c0_5, %c0_6], %5 {strides = array<i32>} : memref<64x32xf32, #tpu.memory_space<vmem>>, vector<64x32xf32>,
    return
  }
  func.func @transform_0(%arg0: i32) -> (i32, i32) {
    %c0_i32 = arith.constant 0 : i32
    %c0_i32_0 = arith.constant 0 : i32
    return %arg0, %c0_i32 : i32, i32
  }
  func.func @transform_1(%arg0: i32) -> (i32, i32) {
    %c0_i32 = arith.constant 0 : i32
    %c0_i32_0 = arith.constant 0 : i32
    %c0_i32_1 = arith.constant 0 : i32
    return %c0_i32, %c0_i32_0 : i32, i32
  }
  func.func @transform_2(%arg0: i32) -> (i32, i32) {
    %c0_i32 = arith.constant 0 : i32
    %c0_i32_0 = arith.constant 0 : i32
    %c0_i32_1 = arith.constant 0 : i32
    return %c0_i32, %c0_i32_0 : i32, i32
  }
  func.func @transform_3(%arg0: i32) -> (i32, i32) {
    %c0_i32 = arith.constant 0 : i32
    %c0_i32_0 = arith.constant 0 : i32
    return %arg0, %c0_i32 : i32, i32
  }
}

</mosaic_0001>

<llo_original>
// kernel: tpu_custom_call.1
$region0: #{tpu_custom_call.1}
  #allocation0 [shape = 'u32[]', space=smem, size = 0x4, offset = 0x4, fixed_abs, tag = 'smem constant byte address 0x4 - core index']
  #allocation1 [shape = 'u32[72,128]{1,0:T(1,128)}', space=vmem, size = 0x9000, scoped, tag = 'internal scratch']
  %s0 = inlined_call_operand.vmem [shape: bf16[64,192], index: 0, kind: input, shape index: {}]
  %s1 = inlined_call_operand.vmem [shape: bf16[192,32], index: 1, kind: input, shape index: {}]
  %s2 = inlined_call_operand.vmem [shape: f32[1,32], index: 2, kind: input, shape index: {}]
  %s3 = inlined_call_operand.vmem [shape: f32[64,32], index: 3, kind: output, shape index: {}]
  %s4 = sld [smem:[#allocation0]]
  $region22: #{tpu_custom_call.1} parent=0
    _
  %s6 = ssub.s32 1, %s4
  %s7 = scalar_select 0, %s6, %s4
  // Predicated region
  $region2: #{tpu_custom_call.1} parent=0 // pred_check
    _
  $region3: #{tpu_custom_call.1} parent=0 // pred_check_branch
    %9 = sbr.rel (0) target = $region5
  $region4: #{tpu_custom_call.1} parent=0 // pred_region
    _
  $region5: #{tpu_custom_call.1} parent=0 // pred_fallthru
    _
  // Predicated region
  $region6: #{tpu_custom_call.1} parent=0 // pred_check
    _
  $region7: #{tpu_custom_call.1} parent=0 // pred_check_branch
    %11 = sbr.rel (0) target = $region9
  $region8: #{tpu_custom_call.1} parent=0 // pred_region
    _
  $region9: #{tpu_custom_call.1} parent=0 // pred_fallthru
    _
  // Predicated region
  $region10: #{tpu_custom_call.1} parent=0 // pred_check
    _
  $region11: #{tpu_custom_call.1} parent=0 // pred_check_branch
    %13 = sbr.rel (0) target = $region13
  $region12: #{tpu_custom_call.1} parent=0 // pred_region
    _
  $region13: #{tpu_custom_call.1} parent=0 // pred_fallthru
    _
  %v15 = vld [vmem:[%s0] sm:$0xff]
  %v16 = vld [vmem:[%s0 + $0x8] sm:$0xff]
  %v17 = vld [vmem:[%s0 + $0x10] sm:$0xff]
  %v18 = vld [vmem:[%s0 + $0x18] sm:$0xff]
  %v19 = vld [vmem:[%s0 + $0x20] sm:$0xff]
  %v20 = vld [vmem:[%s0 + $0x28] sm:$0xff]
  %v21 = vld [vmem:[%s0 + $0x30] sm:$0xff]
  %v22 = vld [vmem:[%s0 + $0x38] sm:$0xff]
  %v23 = vld [vmem:[%s1] sm:$0xf]
  %v24 = vld [vmem:[%s1 + $0x4] sm:$0xf]
  %v25 = vld [vmem:[%s1 + $0x8] sm:$0xf]
  %v26 = vld [vmem:[%s1 + $0xc] sm:$0xf]
  %v27 = vld [vmem:[%s1 + $0x10] sm:$0xf]
  %v28 = vld [vmem:[%s1 + $0x14] sm:$0xf]
  %v29 = vld [vmem:[%s1 + $0x18] sm:$0xf]
  %v30 = vld [vmem:[%s1 + $0x1c] sm:$0xf]
  %v31 = vld [vmem:[%s1 + $0x20] sm:$0xf]
  %v32 = vld [vmem:[%s1 + $0x24] sm:$0xf]
  %v33 = vld [vmem:[%s1 + $0x28] sm:$0xf]
  %v34 = vld [vmem:[%s1 + $0x2c] sm:$0xf]
  %v35 = vld [vmem:[%s1 + $0x30] sm:$0xf]
  %v36 = vld [vmem:[%s1 + $0x34] sm:$0xf]
  %v37 = vld [vmem:[%s1 + $0x38] sm:$0xf]
  %v38 = vld [vmem:[%s1 + $0x3c] sm:$0xf]
  %v39 = vld [vmem:[%s1 + $0x40] sm:$0xf]
  %v40 = vld [vmem:[%s1 + $0x44] sm:$0xf]
  %v41 = vld [vmem:[%s1 + $0x48] sm:$0xf]
  %v42 = vld [vmem:[%s1 + $0x4c] sm:$0xf]
  %v43 = vld [vmem:[%s1 + $0x50] sm:$0xf]
  %v44 = vld [vmem:[%s1 + $0x54] sm:$0xf]
  %v45 = vld [vmem:[%s1 + $0x58] sm:$0xf]
  %v46 = vld [vmem:[%s1 + $0x5c] sm:$0xf]
  %v47 = vld [vmem:[%s2] sm:$0x1]
  %v49 = vperm.slane %v47, 0
  %v59 = vunpack.c.l.b16 %v15
  %v60 = vunpack.c.h.b16 %v15
  %v61 = vunpack.c.l.b16 %v16
  %v62 = vunpack.c.h.b16 %v16
  %v63 = vunpack.c.l.b16 %v17
  %v64 = vunpack.c.h.b16 %v17
  %v65 = vunpack.c.l.b16 %v18
  %v66 = vunpack.c.h.b16 %v18
  %v67 = vunpack.c.l.b16 %v19
  %v68 = vunpack.c.h.b16 %v19
  %v69 = vunpack.c.l.b16 %v20
  %v70 = vunpack.c.h.b16 %v20
  %v71 = vunpack.c.l.b16 %v21
  %v72 = vunpack.c.h.b16 %v21
  %v73 = vunpack.c.l.b16 %v22
  %v74 = vunpack.c.h.b16 %v22
  %v75 = vpack.c.b16 %v61, %v59
  %v76 = vpack.c.b16 %v62, %v60
  %v77 = vpack.c.b16 %v65, %v63
  %v78 = vpack.c.b16 %v66, %v64
  %v79 = vpack.c.b16 %v69, %v67
  %v80 = vpack.c.b16 %v70, %v68
  %v81 = vpack.c.b16 %v73, %v71
  %v82 = vpack.c.b16 %v74, %v72
  %v111 = vunpack.c.l.b16 %v23
  %v112 = vunpack.c.l.b16 %v24
  %v113 = vunpack.c.l.b16 %v25
  %v114 = vunpack.c.l.b16 %v26
  %v115 = vunpack.c.l.b16 %v27
  %v116 = vunpack.c.l.b16 %v28
  %v117 = vunpack.c.l.b16 %v29
  %v118 = vunpack.c.l.b16 %v30
  %v119 = vunpack.c.l.b16 %v31
  %v120 = vunpack.c.l.b16 %v32
  %v121 = vunpack.c.l.b16 %v33
  %v122 = vunpack.c.l.b16 %v34
  %v123 = vunpack.c.l.b16 %v35
  %v124 = vunpack.c.l.b16 %v36
  %v125 = vunpack.c.l.b16 %v37
  %v126 = vunpack.c.l.b16 %v38
  %v127 = vunpack.c.l.b16 %v39
  %v128 = vunpack.c.l.b16 %v40
  %v129 = vunpack.c.l.b16 %v41
  %v130 = vunpack.c.l.b16 %v42
  %v131 = vunpack.c.l.b16 %v43
  %v132 = vunpack.c.l.b16 %v44
  %v133 = vunpack.c.l.b16 %v45
  %v134 = vunpack.c.l.b16 %v46
  %v135 = vpack.c.b16 %v112, %v111
  %v136 = vpack.c.b16 %v114, %v113
  %v137 = vpack.c.b16 %v116, %v115
  %v138 = vpack.c.b16 %v118, %v117
  %v139 = vpack.c.b16 %v120, %v119
  %v140 = vpack.c.b16 %v122, %v121
  %v141 = vpack.c.b16 %v124, %v123
  %v142 = vpack.c.b16 %v126, %v125
  %v143 = vpack.c.b16 %v128, %v127
  %v144 = vpack.c.b16 %v130, %v129
  %v145 = vpack.c.b16 %v132, %v131
  %v146 = vpack.c.b16 %v134, %v133
  %vm159 = vcmask 523264
  %v161 = vsel %vm159, %v76, 0
  %v164 = vsel %vm159, %v78, 0
  %v167 = vsel %vm159, %v80, 0
  %v170 = vsel %vm159, %v82, 0
  %172 = vmatpush.bf16.msra.mxu0 %v142
  %173 = vmatpush.bf16.msra.mxu0 %v141
  %174 = vmatpush.bf16.msra.mxu0 %v140
  %175 = vmatpush.bf16.msra.mxu0 %v139
  %176 = vmatpush.bf16.msra.mxu0 %v138
  %177 = vmatpush.bf16.msra.mxu0 %v137
  %178 = vmatpush.bf16.msra.mxu0 %v136
  %179 = vmatpush.bf16.msra.mxu0 %v135
  %180 = vmatmul.bf16.gmra.mxu0 %v75
  %v181 = vpop.f32.mrf.mxu0
  %v182 = vadd.f32 %v49, %v181
  %v183 = vpop.f32.mrf.mxu0
  %v184 = vadd.f32 %v49, %v183
  %185 = vmatmul.bf16.gmra.mxu0 %v77
  %v186 = vpop.f32.mrf.mxu0
  %v187 = vadd.f32 %v49, %v186
  %v188 = vpop.f32.mrf.mxu0
  %v189 = vadd.f32 %v49, %v188
  %190 = vmatmul.bf16.gmra.mxu0 %v79
  %v191 = vpop.f32.mrf.mxu0
  %v192 = vadd.f32 %v49, %v191
  %v193 = vpop.f32.mrf.mxu0
  %v194 = vadd.f32 %v49, %v193
  %195 = vmatmul.bf16.gmra.mxu0 %v81
  %v196 = vpop.f32.mrf.mxu0
  %v197 = vadd.f32 %v49, %v196
  %v198 = vpop.f32.mrf.mxu0
  %v199 = vadd.f32 %v49, %v198
  %200 = vdwg.mxu0
  %201 = vmatpush.bf16.msra.mxu0 0
  %202 = vmatpush.bf16.msra.mxu0 0
  %203 = vmatpush.bf16.msra.mxu0 0
  %204 = vmatpush.bf16.msra.mxu0 0
  %205 = vmatpush.bf16.msra.mxu0 %v146
  %206 = vmatpush.bf16.msra.mxu0 %v145
  %207 = vmatpush.bf16.msra.mxu0 %v144
  %208 = vmatpush.bf16.msra.mxu0 %v143
  %209 = vmatmul.bf16.gmra.mxu0 %v161
  %v210 = vpop.f32.mrf.mxu0
  %v211 = vadd.f32 %v182, %v210
  %v212 = vpop.f32.mrf.mxu0
  %v213 = vadd.f32 %v184, %v212
  %214 = vmatmul.bf16.gmra.mxu0 %v164
  %v215 = vpop.f32.mrf.mxu0
  %v216 = vadd.f32 %v187, %v215
  %v217 = vpop.f32.mrf.mxu0
  %v218 = vadd.f32 %v189, %v217
  %219 = vmatmul.bf16.gmra.mxu0 %v167
  %v220 = vpop.f32.mrf.mxu0
  %v221 = vadd.f32 %v192, %v220
  %v222 = vpop.f32.mrf.mxu0
  %v223 = vadd.f32 %v194, %v222
  %224 = vmatmul.bf16.gmra.mxu0 %v170
  %v225 = vpop.f32.mrf.mxu0
  %v226 = vadd.f32 %v197, %v225
  %v227 = vpop.f32.mrf.mxu0
  %v228 = vadd.f32 %v199, %v227
  %229 = vdwg.mxu0
  %vm230 = vcmask 261120
  %231 = vst.msk [vmem:[%s3] sm:$0xff] %vm230, %v211
  %232 = vst.msk [vmem:[%s3 + $0x8] sm:$0xff] %vm230, %v213
  %233 = vst.msk [vmem:[%s3 + $0x10] sm:$0xff] %vm230, %v216
  %234 = vst.msk [vmem:[%s3 + $0x18] sm:$0xff] %vm230, %v218
  %235 = vst.msk [vmem:[%s3 + $0x20] sm:$0xff] %vm230, %v221
  %236 = vst.msk [vmem:[%s3 + $0x28] sm:$0xff] %vm230, %v223
  %237 = vst.msk [vmem:[%s3 + $0x30] sm:$0xff] %vm230, %v226
  %238 = vst.msk [vmem:[%s3 + $0x38] sm:$0xff] %vm230, %v228
  // Predicated region
  $region14: #{tpu_custom_call.1} parent=0 // pred_check
    _
  $region15: #{tpu_custom_call.1} parent=0 // pred_check_branch
    %240 = sbr.rel (0) target = $region17
  $region16: #{tpu_custom_call.1} parent=0 // pred_region
    _
  $region17: #{tpu_custom_call.1} parent=0 // pred_fallthru
    _
  // Predicated region
  $region18: #{tpu_custom_call.1} parent=0 // pred_check
    _
  $region19: #{tpu_custom_call.1} parent=0 // pred_check_branch
    %242 = sbr.rel (0) target = $region21
  $region20: #{tpu_custom_call.1} parent=0 // pred_region
    _
  $region21: #{tpu_custom_call.1} parent=0 // pred_fallthru
    _

</llo_original>
